<compile_context>
chip_gen: v7x
topology: tpu7x:2x2x1
jax: 0.10.0
libtpu: 0.0.40
codegen_flags: <defaults>
</compile_context>

<pallas_src>
import jax
import jax.numpy as jnp
from jax.experimental import pallas as pl
from jax.experimental.pallas import tpu as pltpu

_LANE = 128


def _relu_kernel(x_ref, o_ref):
    # Pure elementwise max(x, 0); in/out dtypes identical, no cast.
    o_ref[...] = jnp.maximum(x_ref[...], 0)


def _vmem_capacity_bytes() -> int:
    try:
        return int(pltpu.get_tpu_info().vmem_capacity_bytes)
    except Exception:
        return 128 * 1024 * 1024  # conservative fallback (v5e/v6e physical)


def _pick_block_and_limit(vmem_bytes: int):
    """(per-buffer block bytes, vmem_limit_bytes) tuned per TPU generation."""
    if vmem_bytes <= 64 * 1024 * 1024:
        # v7x: 64 MiB VMEM per TC, 3.2 TB/s HBM -> big blocks amortize the
        # ~0.35us per-grid-step overhead.  4 x 6 MiB = 24 MiB live < 48 MiB.
        return 6 * 1024 * 1024, 48 * 1024 * 1024
    # v5e / v6e (128 MiB physical VMEM): 4 MiB blocks, explicit 32 MiB limit
    # (documents the budget and clears v5e's 16 MiB scoped default).
    return 4 * 1024 * 1024, 32 * 1024 * 1024


def _relu_flat_aligned(flat: jax.Array) -> jax.Array:
    """ReLU on a 1-D array whose length is a multiple of 128."""
    n = flat.shape[0]
    dtype = flat.dtype
    itemsize = jnp.dtype(dtype).itemsize

    # Widest lane-dense slab width (multiple of 128) that divides n exactly,
    # so no padding copies are ever needed on this path.
    width = _LANE
    for cand in (8192, 4096, 2048, 1024, 512, 256, _LANE):
        if n % cand == 0:
            width = cand
            break
    rows = n // width

    # Sublane multiple for the second-to-last block dim (8 f32 / 16 bf16 / 32 i8).
    sub_mult = max(8, 32 // itemsize)

    block_bytes, vmem_limit = _pick_block_and_limit(_vmem_capacity_bytes())
    block_rows = max(1, block_bytes // (width * itemsize))

    if block_rows >= rows:
        # Whole slab fits in one block.  For anything larger than a few MiB,
        # split into >=2 grid steps so the "parallel" grid axis can shard
        # across v7x's two TensorCores (no effect on v5e/v6e single-TC).
        total_bytes = rows * width * itemsize
        half = (((rows + 1) // 2 + sub_mult - 1) // sub_mult) * sub_mult
        if total_bytes >= (4 << 20) and half < rows:
            block_rows = half
        else:
            block_rows = rows  # full extent: always a legal block shape
    else:
        block_rows = max(sub_mult, (block_rows // sub_mult) * sub_mult)
        # Prefer a block size near the target that divides `rows` evenly,
        # eliminating the masked partial last block (vst.msk epilogue).
        cand = block_rows
        lo = max(sub_mult, block_rows // 2)
        while cand >= lo:
            if rows % cand == 0:
                block_rows = cand
                break
            cand -= sub_mult

    grid = (pl.cdiv(rows, block_rows),)

    out2d = pl.pallas_call(
        _relu_kernel,
        out_shape=jax.ShapeDtypeStruct((rows, width), dtype),
        grid_spec=pltpu.PrefetchScalarGridSpec(
            num_scalar_prefetch=0,
            grid=grid,
            in_specs=[pl.BlockSpec((block_rows, width), lambda i: (i, 0))],
            out_specs=pl.BlockSpec((block_rows, width), lambda i: (i, 0)),
        ),
        compiler_params=pltpu.CompilerParams(
            dimension_semantics=("parallel",),
            vmem_limit_bytes=vmem_limit,
        ),
        cost_estimate=pl.CostEstimate(
            flops=n,
            transcendentals=0,
            bytes_accessed=2 * n * itemsize,
        ),
    )(flat.reshape(rows, width))

    return out2d.reshape(-1)


def pallas_relu(x: jax.Array) -> jax.Array:
    """Elementwise ReLU. Accepts any shape/dtype; returns same shape/dtype."""
    orig_shape = x.shape
    n = x.size
    if n == 0:
        return x
    flat = x.reshape(-1)

    n_main = (n // _LANE) * _LANE
    if n_main == n:
        return _relu_flat_aligned(flat).reshape(orig_shape)
    if n_main == 0:
        # Entire tensor is a sub-vreg tail (<128 elems): plain VPU op suffices.
        return jnp.maximum(flat, 0).reshape(orig_shape)
    # Prefix + tail split: the 128-aligned prefix streams through the kernel
    # at the 1-read/1-write minimum; the <=127-element tail is computed
    # directly (no pad / slice HBM passes over the big slab).
    main = _relu_flat_aligned(flat[:n_main])
    tail = jnp.maximum(flat[n_main:], 0)
    return jnp.concatenate([main, tail]).reshape(orig_shape)


class ReLUModule:
    """JAX analogue of safe_regions.layers.ReLU (eval-mode forward)."""

    def __init__(self):
        # Region statistics are Python-side training state; no parameters.
        self.region_state = None

    def __call__(self, x):
        return pallas_relu(x)


if __name__ == "__main__":
    key = jax.random.PRNGKey(0)
    # NCHW input consistent with a conv-net activation: batch=2, C=4, H=W=16
    x = jax.random.normal(key, (2, 4, 16, 16), dtype=jnp.float32)

    mod = ReLUModule()
    y = mod(x)
    y = jax.block_until_ready(y)

    # correctness check against plain JAX reference
    ref = jnp.maximum(x, 0.0)
    assert y.shape == x.shape and y.dtype == x.dtype
    assert bool(jnp.allclose(y, ref)), "mismatch vs reference ReLU"

    # also exercise a non-multiple-of-128 size (prefix + tail path)
    x2 = jax.random.normal(jax.random.PRNGKey(1), (3, 5, 7), dtype=jnp.float32)
    y2 = jax.block_until_ready(mod(x2))
    assert bool(jnp.allclose(y2, jnp.maximum(x2, 0.0))), "mismatch on tail path"

    print("KERNEL_OK")
</pallas_src>

<mosaic_0001>
module attributes {stable_mosaic.version = 11 : i64} {
  func.func @_relu_kernel(%arg0: i32, %arg1: memref<1x2048xf32, #tpu.memory_space<vmem>>, %arg2: memref<1x2048xf32, #tpu.memory_space<vmem>>) attributes {dimension_semantics = [#tpu.dimension_semantics<parallel>], iteration_bounds = array<i64: 1>, scalar_prefetch = 0 : i64, scratch_operands = 0 : i64, tpu.core_type = #tpu.core_type<tc>, window_params = [{transform_indices = @transform_0, window_bounds = array<i64: 1, 2048>}, {transform_indices = @transform_1, window_bounds = array<i64: 1, 2048>}]} {
    %c0 = arith.constant 0 : index
    %c0_0 = arith.constant 0 : index
    %0 = vector.load %arg1[%c0, %c0_0] : memref<1x2048xf32, #tpu.memory_space<vmem>>, vector<1x2048xf32>
    %cst = arith.constant 0.000000e+00 : f32
    %1 = vector.broadcast %cst : f32 to vector<1x2048xf32>
    %2 = arith.maximumf %0, %1 : vector<1x2048xf32>
    %c0_1 = arith.constant 0 : index
    %c0_2 = arith.constant 0 : index
    %3 = vector.load %arg2[%c0_1, %c0_2] : memref<1x2048xf32, #tpu.memory_space<vmem>>, vector<1x2048xf32>
    tpu.vector_store %arg2[%c0_1, %c0_2], %2 {strides = array<i32>} : memref<1x2048xf32, #tpu.memory_space<vmem>>, vector<1x2048xf32>,
    return
  }
  func.func @transform_0(%arg0: i32) -> (i32, i32) {
    %c0_i32 = arith.constant 0 : i32
    %c0_i32_0 = arith.constant 0 : i32
    return %arg0, %c0_i32 : i32, i32
  }
  func.func @transform_1(%arg0: i32) -> (i32, i32) {
    %c0_i32 = arith.constant 0 : i32
    %c0_i32_0 = arith.constant 0 : i32
    return %arg0, %c0_i32 : i32, i32
  }
}

</mosaic_0001>

<llo_original>
// kernel: tpu_custom_call.1
$region0: #{tpu_custom_call.1}
  #allocation0 [shape = 'u32[]', space=smem, size = 0x4, offset = 0x4, fixed_abs, tag = 'smem constant byte address 0x4 - core index']
  #allocation1 [shape = 'u32[144,128]{1,0:T(1,128)}', space=vmem, size = 0x12000, scoped, tag = 'internal scratch']
  %s0 = inlined_call_operand.hbm [shape: f32[1,2048], index: 0, kind: input, shape index: {}]
  %s1 = inlined_call_operand.hbm [shape: f32[1,2048], index: 1, kind: output, shape index: {}]
  %s2 = sld [smem:[#allocation0]]
  $region18: #{tpu_custom_call.1} parent=0
    _
  %s4 = ssub.s32 1, %s2
  %s5 = scalar_select 0, %s4, %s2
  $region1: #{tpu_custom_call.1} parent=0
    #allocation2 [shape = 'u8[8192]{0}', space=vmem, size = 0x2000, scoped, tag = 'input window, operand 0, single buffered']
    #allocation3 [shape = 's32[1]{0}', space=sflag, size = 0x4, scoped, tag = 'scoped memory for tpu_custom_call.1']
    #allocation4 [shape = 's32[1]{0}', space=sflag, size = 0x4, scoped, tag = 'scoped memory for tpu_custom_call.1']
    #allocation5 [shape = 'u8[8192]{0}', space=vmem, size = 0x2000, scoped, tag = 'output window, operand 0, single buffered']
    %6 = vsyncpa [#allocation3], 0
    %7 = vsyncpa [#allocation4], 0
    // Predicated region
    $region2: #{tpu_custom_call.1} parent=1 // pred_check
      _
    $region3: #{tpu_custom_call.1} parent=1 // pred_check_branch
      %9 = sbr.rel (0) target = $region5
    $region4: #{tpu_custom_call.1} parent=1 // pred_region
      %s11 = ssub.s32 256, 256
      %12 = vsyncadd [#allocation3], %s11
      %s14 = sshll.u32 [#allocation2], 4
      %s15 = int_to_ptr.vmem [resolvable:$true] %s14
      %17 = dma.hbm_to_vmem [thread:$0]  %s0, 256, %s15, [#allocation3]
    $region5: #{tpu_custom_call.1} parent=1 // pred_fallthru
      _
    // Predicated region
    $region6: #{tpu_custom_call.1} parent=1 // pred_check
      _
    $region7: #{tpu_custom_call.1} parent=1 // pred_check_branch
      %19 = sbr.rel (0) target = $region9
    $region8: #{tpu_custom_call.1} parent=1 // pred_region
      %20 = dma.done [#allocation3], 256
    $region9: #{tpu_custom_call.1} parent=1 // pred_fallthru
      _
    %v21 = vld [vmem:[#allocation2] sm:$0xff]
    %v22 = vld [vmem:[#allocation2 + $0x8] sm:$0xff]
    %v23 = vmax.f32 %v21, 0.0
    %v24 = vmax.f32 %v22, 0.0
    %25 = vst [vmem:[#allocation5] sm:$0xff] %v23
    %26 = vst [vmem:[#allocation5 + $0x8] sm:$0xff] %v24
    // Predicated region
    $region10: #{tpu_custom_call.1} parent=1 // pred_check
      _
    $region11: #{tpu_custom_call.1} parent=1 // pred_check_branch
      %28 = sbr.rel (0) target = $region13
    $region12: #{tpu_custom_call.1} parent=1 // pred_region
      %s30 = ssub.s32 256, 256
      %31 = vsyncadd [#allocation4], %s30
      %s33 = sshll.u32 [#allocation5], 4
      %s34 = int_to_ptr.vmem [resolvable:$true] %s33
      %36 = dma.vmem_to_hbm [thread:$0]  %s34, 256, %s1, [#allocation4]
    $region13: #{tpu_custom_call.1} parent=1 // pred_fallthru
      _
    // Predicated region
    $region14: #{tpu_custom_call.1} parent=1 // pred_check
      _
    $region15: #{tpu_custom_call.1} parent=1 // pred_check_branch
      %38 = sbr.rel (0) target = $region17
    $region16: #{tpu_custom_call.1} parent=1 // pred_region
      %39 = dma.done [#allocation4], 256
    $region17: #{tpu_custom_call.1} parent=1 // pred_fallthru
      _
    %40 = vsyncpa [#allocation3], 1
    %41 = vsyncpa [#allocation4], 1

</llo_original>
